<compile_context>
chip_gen: v7x
topology: tpu7x:2x2x1
jax: 0.10.0
libtpu: 0.0.40
codegen_flags: <defaults>
</compile_context>

<pallas_src>
import math
import functools

import jax
import jax.numpy as jnp
from jax.experimental import pallas as pl
from jax.experimental.pallas import tpu as pltpu

LANE = 128


def _ceil_div(a, b):
    return -(-a // b)


def _round_up(a, b):
    return _ceil_div(a, b) * b


# ----------------------------------------------------------------------------
# PE table (same construction as the PyTorch __init__), shape (max_len, d_model)
# ----------------------------------------------------------------------------
def make_positional_encoding_table(d_model, max_len=5000, dtype=jnp.float32):
    position = jnp.arange(max_len, dtype=jnp.float32)[:, None]
    div_term = jnp.exp(
        jnp.arange(0, d_model, 2, dtype=jnp.float32) * (-math.log(10000.0) / d_model)
    )
    pe = jnp.zeros((max_len, d_model), dtype=jnp.float32)
    pe = pe.at[:, 0::2].set(jnp.sin(position * div_term))
    pe = pe.at[:, 1::2].set(jnp.cos(position * div_term))
    return pe.astype(dtype)


# ----------------------------------------------------------------------------
# Dropout helpers
# ----------------------------------------------------------------------------
def _dropout_threshold_i32(p):
    # keep = (int32 bits >= t) has probability (2^31 - t) / 2^32 = 1 - p
    t = int(round(float(p) * (1 << 32))) - (1 << 31)
    return max(-(1 << 31), min(t, (1 << 31) - 1))


# ----------------------------------------------------------------------------
# Kernels.  x/out tiles are (ts, B*Dp), pe tile is (ts, Dp); the pe broadcast is
# done by adding the same pe vregs to each 128-aligned per-batch lane slice.
# ----------------------------------------------------------------------------
def _pe_eval_kernel(x_ref, pe_ref, o_ref, *, batch, dp):
    pe = pe_ref[...]                                   # (ts, Dp), loaded once
    for b in range(batch):
        sl = pl.ds(b * dp, dp)                         # static, 128-lane aligned
        o_ref[:, sl] = (x_ref[:, sl] + pe).astype(o_ref.dtype)


def _pe_train_hw_kernel(seed_ref, x_ref, pe_ref, o_ref, *, batch, dp, threshold, scale):
    # Two independent seed words (global seed, tile id) -> decorrelated per-tile streams.
    pltpu.prng_seed(seed_ref[0], pl.program_id(0))
    raw = pltpu.prng_random_bits(o_ref.shape)          # one draw for the whole tile
    bits = raw if raw.dtype == jnp.int32 else pltpu.bitcast(raw, jnp.int32)
    # TODO(synk): on v7x, if PRNG ever becomes the binding unit, draw 1/4 of the
    # 32-bit words and compare per-byte against an 8-bit threshold (4x less PRNG).
    pe = pe_ref[...]
    thr = jnp.int32(threshold)
    for b in range(batch):
        sl = pl.ds(b * dp, dp)
        y = x_ref[:, sl] + pe
        keep = bits[:, b * dp:(b + 1) * dp] >= thr
        o_ref[:, sl] = jnp.where(keep, y * scale, jnp.zeros_like(y)).astype(o_ref.dtype)


def _pe_train_bits_kernel(x_ref, pe_ref, bits_ref, o_ref, *, batch, dp, threshold, scale):
    pe = pe_ref[...]
    thr = jnp.int32(threshold)
    for b in range(batch):
        sl = pl.ds(b * dp, dp)
        y = x_ref[:, sl] + pe
        keep = bits_ref[:, sl] >= thr
        o_ref[:, sl] = jnp.where(keep, y * scale, jnp.zeros_like(y)).astype(o_ref.dtype)


# ----------------------------------------------------------------------------
# Generation- and dtype-aware tiling heuristics
# ----------------------------------------------------------------------------
def _tpu_generation():
    try:
        kind = jax.devices()[0].device_kind.lower()
    except Exception:
        kind = ""
    if "v7" in kind or "tpu7" in kind:
        return 7
    if "v6" in kind:
        return 6
    if "v5" in kind:
        return 5
    return 6  # neutral default


def _tuning_for_generation(gen):
    # (target_tile_bytes, vmem_limit_bytes, min_grid_steps, prefer_even_steps)
    if gen >= 7:   # 2 TCs/chip, 64 MiB VMEM/TC, ~3.2 TB/s HBM
        return 5 * 1024 * 1024, 48 * 1024 * 1024, 16, True
    if gen == 6:   # 1 TC, 128 MiB VMEM, ~1.4 TB/s HBM
        return 4 * 1024 * 1024, 64 * 1024 * 1024, 8, False
    return 2 * 1024 * 1024, 64 * 1024 * 1024, 8, False  # v5e


def _choose_seq_tile(S, row_bytes, itemsize, *, target_tile_bytes, min_grid_steps,
                     prefer_even_steps):
    # Sublane multiple is dtype-aware: sub-32-bit dtypes pack along sublanes.
    sub = {4: 8, 2: 16, 1: 32}.get(int(itemsize), 8)
    if S <= sub:
        return S                        # single full-seq block (always legal)
    ts_cap = max(sub, target_tile_bytes // max(row_bytes, 1))
    if S >= sub * min_grid_steps:       # keep enough steps for pipelining / megacore
        ts_cap = min(ts_cap, _ceil_div(S, min_grid_steps))
    ts = min(ts_cap, S)
    ts = max(sub, (ts // sub) * sub)
    if prefer_even_steps:               # v7x: even step count -> both TCs equal work
        steps = _ceil_div(S, ts)
        if steps > 1 and steps % 2 == 1:
            ts_even = _round_up(_ceil_div(S, steps + 1), sub)
            if ts_even >= sub and _ceil_div(S, ts_even) % 2 == 0:
                ts = ts_even
    return ts


# ----------------------------------------------------------------------------
# Wrapper
# ----------------------------------------------------------------------------
def positional_encoding(x, pe_table, *, p=0.1, training=False, seed=0,
                        ts=None, use_hw_prng=None, force_pallas=False):
    """x: (S, B, D).  Returns dropout(x + pe[:S]) with pe broadcast over batch."""
    S, B, D = x.shape
    assert pe_table.shape[0] >= S and pe_table.shape[1] == D

    apply_dropout = bool(training) and float(p) > 0.0
    if not apply_dropout and not force_pallas:
        # Eval mode: a bare memory-bound add.  Returning the plain JAX expression
        # lets XLA fuse it into neighbours instead of paying a standalone HBM pass.
        return x + pe_table[:S].astype(x.dtype)[:, None, :]
    if apply_dropout and float(p) >= 1.0:
        return jnp.zeros_like(x)

    # --- lane-dense layout: (S, B*Dp) with Dp a multiple of 128 ----------------
    Dp = _round_up(D, LANE)
    pe_sl = pe_table[:S].astype(x.dtype)
    if Dp != D:
        # Padding costs one extra x-sized HBM pass; only hit when d_model is not
        # already a multiple of 128 (real transformer widths are).
        x_k = jnp.pad(x, ((0, 0), (0, 0), (0, Dp - D)))
        pe_k = jnp.pad(pe_sl, ((0, 0), (0, Dp - D)))
    else:
        x_k, pe_k = x, pe_sl
    x2 = x_k.reshape(S, B * Dp)         # free row-major reshape, lane-dense output

    # --- generation/dtype-aware seq tiling -------------------------------------
    gen = _tpu_generation()
    target_tile, vmem_limit, min_steps, even_steps = _tuning_for_generation(gen)
    itemsize = jnp.dtype(x.dtype).itemsize
    row_bytes = B * Dp * itemsize
    if ts is None:
        ts = _choose_seq_tile(S, row_bytes, itemsize,
                              target_tile_bytes=target_tile,
                              min_grid_steps=min_steps,
                              prefer_even_steps=even_steps)
    ts = min(ts, S)
    grid = (pl.cdiv(S, ts),)            # partial trailing tile -> masked stores

    x_spec = pl.BlockSpec((ts, B * Dp), lambda i: (i, 0))
    pe_spec = pl.BlockSpec((ts, Dp), lambda i: (i, 0))
    out_spec = pl.BlockSpec((ts, B * Dp), lambda i: (i, 0))
    out_shape = jax.ShapeDtypeStruct((S, B * Dp), x.dtype)
    cparams = pltpu.CompilerParams(
        dimension_semantics=("parallel",),   # independent tiles -> 2 TCs on v7x
        vmem_limit_bytes=vmem_limit,
    )

    if not apply_dropout:
        out2 = pl.pallas_call(
            functools.partial(_pe_eval_kernel, batch=B, dp=Dp),
            out_shape=out_shape, grid=grid,
            in_specs=[x_spec, pe_spec], out_specs=out_spec,
            compiler_params=cparams,
        )(x2, pe_k)
    else:
        threshold = _dropout_threshold_i32(p)
        scale = 1.0 / (1.0 - float(p))
        if use_hw_prng is None:
            use_hw_prng = jax.default_backend() == "tpu"
        if use_hw_prng:
            seed_arr = jnp.array([seed], dtype=jnp.int32)
            out2 = pl.pallas_call(
                functools.partial(_pe_train_hw_kernel, batch=B, dp=Dp,
                                  threshold=threshold, scale=scale),
                out_shape=out_shape, grid=grid,
                in_specs=[pl.BlockSpec(memory_space=pltpu.MemorySpace.SMEM),  # seed
                          x_spec, pe_spec],
                out_specs=out_spec, compiler_params=cparams,
            )(seed_arr, x2, pe_k)
        else:
            # TODO(synk): fallback for backends where pltpu.prng_* has no lowering
            # (CPU interpret); bits drawn with jax.random and streamed in (one
            # extra x-sized HBM read, training mode only).
            bits = jax.lax.bitcast_convert_type(
                jax.random.bits(jax.random.PRNGKey(int(seed)), (S, B * Dp),
                                dtype=jnp.uint32),
                jnp.int32)
            bits_spec = pl.BlockSpec((ts, B * Dp), lambda i: (i, 0))
            out2 = pl.pallas_call(
                functools.partial(_pe_train_bits_kernel, batch=B, dp=Dp,
                                  threshold=threshold, scale=scale),
                out_shape=out_shape, grid=grid,
                in_specs=[x_spec, pe_spec, bits_spec],
                out_specs=out_spec, compiler_params=cparams,
            )(x2, pe_k, bits)

    out = out2.reshape(S, B, Dp)
    if Dp != D:
        out = out[:, :, :D]
    return out


# ----------------------------------------------------------------------------
# Demo / self-test
# ----------------------------------------------------------------------------
if __name__ == "__main__":
    key = jax.random.PRNGKey(0)
    S, B, D = 8, 2, 32            # (seq_len, batch, d_model)
    MAX_LEN = 64
    P = 0.1

    x = jax.random.normal(key, (S, B, D), dtype=jnp.float32)
    pe = make_positional_encoding_table(D, max_len=MAX_LEN)
    ref = x + pe[:S][:, None, :]

    # Eval mode, default (fused XLA add): must match the pure-JAX reference.
    y = jax.block_until_ready(positional_encoding(x, pe, p=P, training=False))
    assert y.shape == x.shape and y.dtype == x.dtype
    assert jnp.allclose(y, ref, atol=1e-6), float(jnp.max(jnp.abs(y - ref)))

    # Eval mode, forced through the Pallas kernel: exercises the kernel path.
    y_k = jax.block_until_ready(
        positional_encoding(x, pe, p=P, training=False, force_pallas=True))
    assert y_k.shape == x.shape and y_k.dtype == x.dtype
    assert jnp.allclose(y_k, ref, atol=1e-6), float(jnp.max(jnp.abs(y_k - ref)))

    # Training mode (stochastic inverted dropout).  Every surviving element must
    # equal (x + pe) / (1 - p); dropped elements are exactly zero.
    # TODO(synk): PyTorch's dropout RNG stream cannot be reproduced bit-exactly;
    # only the distributional semantics are matched.
    y_tr = jax.block_until_ready(
        positional_encoding(x, pe, p=P, training=True, seed=42))
    assert y_tr.shape == x.shape and y_tr.dtype == x.dtype
    scale = 1.0 / (1.0 - P)
    consistent = jnp.all((y_tr == 0.0) | (jnp.abs(y_tr - ref * scale) < 1e-4))
    assert bool(consistent)

    print("KERNEL_OK")
</pallas_src>

<mosaic_0001>
module attributes {stable_mosaic.version = 11 : i64} {
  func.func @_pe_eval_kernel(%arg0: i32, %arg1: memref<8x256xf32, #tpu.memory_space<vmem>>, %arg2: memref<8x128xf32, #tpu.memory_space<vmem>>, %arg3: memref<8x256xf32, #tpu.memory_space<vmem>>) attributes {dimension_semantics = [#tpu.dimension_semantics<parallel>], iteration_bounds = array<i64: 1>, scalar_prefetch = 0 : i64, scratch_operands = 0 : i64, tpu.core_type = #tpu.core_type<tc>, window_params = [{transform_indices = @transform_0, window_bounds = array<i64: 8, 256>}, {transform_indices = @transform_1, window_bounds = array<i64: 8, 128>}, {transform_indices = @transform_2, window_bounds = array<i64: 8, 256>}]} {
    %c0 = arith.constant 0 : index
    %c0_0 = arith.constant 0 : index
    %0 = vector.load %arg2[%c0, %c0_0] : memref<8x128xf32, #tpu.memory_space<vmem>>, vector<8x128xf32>
    %c0_1 = arith.constant 0 : index
    %c0_2 = arith.constant 0 : index
    %1 = vector.load %arg1[%c0_1, %c0_2] : memref<8x256xf32, #tpu.memory_space<vmem>>, vector<8x128xf32>
    %2 = arith.addf %1, %0 : vector<8x128xf32>
    %c0_3 = arith.constant 0 : index
    %c0_4 = arith.constant 0 : index
    %3 = vector.load %arg3[%c0_3, %c0_4] : memref<8x256xf32, #tpu.memory_space<vmem>>, vector<8x128xf32>
    tpu.vector_store %arg3[%c0_3, %c0_4], %2 {strides = array<i32>} : memref<8x256xf32, #tpu.memory_space<vmem>>, vector<8x128xf32>,
    %c0_5 = arith.constant 0 : index
    %c128 = arith.constant 128 : index
    %4 = vector.load %arg1[%c0_5, %c128] : memref<8x256xf32, #tpu.memory_space<vmem>>, vector<8x128xf32>
    %5 = arith.addf %4, %0 : vector<8x128xf32>
    %c0_6 = arith.constant 0 : index
    %c128_7 = arith.constant 128 : index
    %6 = vector.load %arg3[%c0_6, %c128_7] : memref<8x256xf32, #tpu.memory_space<vmem>>, vector<8x128xf32>
    tpu.vector_store %arg3[%c0_6, %c128_7], %5 {strides = array<i32>} : memref<8x256xf32, #tpu.memory_space<vmem>>, vector<8x128xf32>,
    return
  }
  func.func @transform_0(%arg0: i32) -> (i32, i32) {
    %c0_i32 = arith.constant 0 : i32
    %c0_i32_0 = arith.constant 0 : i32
    return %arg0, %c0_i32 : i32, i32
  }
  func.func @transform_1(%arg0: i32) -> (i32, i32) {
    %c0_i32 = arith.constant 0 : i32
    %c0_i32_0 = arith.constant 0 : i32
    return %arg0, %c0_i32 : i32, i32
  }
  func.func @transform_2(%arg0: i32) -> (i32, i32) {
    %c0_i32 = arith.constant 0 : i32
    %c0_i32_0 = arith.constant 0 : i32
    return %arg0, %c0_i32 : i32, i32
  }
}

</mosaic_0001>

<llo_original>
// kernel: tpu_custom_call.1
$region0: #{tpu_custom_call.1}
  #allocation0 [shape = 'u32[]', space=smem, size = 0x4, offset = 0x4, fixed_abs, tag = 'smem constant byte address 0x4 - core index']
  #allocation1 [shape = 'u32[144,128]{1,0:T(1,128)}', space=vmem, size = 0x12000, scoped, tag = 'internal scratch']
  %s0 = inlined_call_operand.hbm [shape: f32[8,256], index: 0, kind: input, shape index: {}]
  %s1 = inlined_call_operand.hbm [shape: f32[8,128], index: 1, kind: input, shape index: {}]
  %s2 = inlined_call_operand.hbm [shape: f32[8,256], index: 2, kind: output, shape index: {}]
  %s3 = sld [smem:[#allocation0]]
  $region26: #{tpu_custom_call.1} parent=0
    _
  %s5 = ssub.s32 1, %s3
  %s6 = scalar_select 0, %s5, %s3
  $region1: #{tpu_custom_call.1} parent=0
    #allocation2 [shape = 'u8[8192]{0}', space=vmem, size = 0x2000, scoped, tag = 'input window, operand 0, single buffered']
    #allocation3 [shape = 's32[1]{0}', space=sflag, size = 0x4, scoped, tag = 'scoped memory for tpu_custom_call.1']
    #allocation4 [shape = 's32[1]{0}', space=sflag, size = 0x4, scoped, tag = 'scoped memory for tpu_custom_call.1']
    #allocation5 [shape = 'u8[4096]{0}', space=vmem, size = 0x1000, scoped, tag = 'input window, operand 1, single buffered']
    #allocation6 [shape = 's32[1]{0}', space=sflag, size = 0x4, scoped, tag = 'scoped memory for tpu_custom_call.1']
    #allocation7 [shape = 'u8[8192]{0}', space=vmem, size = 0x2000, scoped, tag = 'output window, operand 0, single buffered']
    %7 = vsyncpa [#allocation3], 0
    %8 = vsyncpa [#allocation6], 0
    %9 = vsyncpa [#allocation4], 0
    // Predicated region
    $region2: #{tpu_custom_call.1} parent=1 // pred_check
      _
    $region3: #{tpu_custom_call.1} parent=1 // pred_check_branch
      %11 = sbr.rel (0) target = $region5
    $region4: #{tpu_custom_call.1} parent=1 // pred_region
      %s13 = ssub.s32 256, 256
      %14 = vsyncadd [#allocation3], %s13
      %s16 = sshll.u32 [#allocation2], 4
      %s17 = int_to_ptr.vmem [resolvable:$true] %s16
      %19 = dma.hbm_to_vmem [thread:$0]  %s0, 256, %s17, [#allocation3]
    $region5: #{tpu_custom_call.1} parent=1 // pred_fallthru
      _
    // Predicated region
    $region6: #{tpu_custom_call.1} parent=1 // pred_check
      _
    $region7: #{tpu_custom_call.1} parent=1 // pred_check_branch
      %21 = sbr.rel (0) target = $region9
    $region8: #{tpu_custom_call.1} parent=1 // pred_region
      %s23 = ssub.s32 128, 128
      %24 = vsyncadd [#allocation6], %s23
      %s26 = sshll.u32 [#allocation5], 4
      %s27 = int_to_ptr.vmem [resolvable:$true] %s26
      %29 = dma.hbm_to_vmem [thread:$0]  %s1, 128, %s27, [#allocation6]
    $region9: #{tpu_custom_call.1} parent=1 // pred_fallthru
      _
    // Predicated region
    $region10: #{tpu_custom_call.1} parent=1 // pred_check
      _
    $region11: #{tpu_custom_call.1} parent=1 // pred_check_branch
      %31 = sbr.rel (0) target = $region13
    $region12: #{tpu_custom_call.1} parent=1 // pred_region
      %32 = dma.done [#allocation3], 256
    $region13: #{tpu_custom_call.1} parent=1 // pred_fallthru
      _
    // Predicated region
    $region14: #{tpu_custom_call.1} parent=1 // pred_check
      _
    $region15: #{tpu_custom_call.1} parent=1 // pred_check_branch
      %34 = sbr.rel (0) target = $region17
    $region16: #{tpu_custom_call.1} parent=1 // pred_region
      %35 = dma.done [#allocation6], 128
    $region17: #{tpu_custom_call.1} parent=1 // pred_fallthru
      _
    %v36 = vld [vmem:[#allocation5] sm:$0xff]
    %v37 = vld [vmem:[#allocation2] sm:$0xff]
    %v38 = vadd.f32 %v37, %v36
    %39 = vst [vmem:[#allocation7] sm:$0xff] %v38
    %v40 = vld [vmem:[#allocation2 + $0x8] sm:$0xff]
    %v41 = vadd.f32 %v40, %v36
    %42 = vst [vmem:[#allocation7 + $0x8] sm:$0xff] %v41
    // Predicated region
    $region18: #{tpu_custom_call.1} parent=1 // pred_check
      _
    $region19: #{tpu_custom_call.1} parent=1 // pred_check_branch
      %44 = sbr.rel (0) target = $region21
    $region20: #{tpu_custom_call.1} parent=1 // pred_region
      %s46 = ssub.s32 256, 256
      %47 = vsyncadd [#allocation4], %s46
      %s49 = sshll.u32 [#allocation7], 4
      %s50 = int_to_ptr.vmem [resolvable:$true] %s49
      %52 = dma.vmem_to_hbm [thread:$0]  %s50, 256, %s2, [#allocation4]
    $region21: #{tpu_custom_call.1} parent=1 // pred_fallthru
      _
    // Predicated region
    $region22: #{tpu_custom_call.1} parent=1 // pred_check
      _
    $region23: #{tpu_custom_call.1} parent=1 // pred_check_branch
      %54 = sbr.rel (0) target = $region25
    $region24: #{tpu_custom_call.1} parent=1 // pred_region
      %55 = dma.done [#allocation4], 256
    $region25: #{tpu_custom_call.1} parent=1 // pred_fallthru
      _
    %56 = vsyncpa [#allocation3], 1
    %57 = vsyncpa [#allocation6], 1
    %58 = vsyncpa [#allocation4], 1

</llo_original>
